<compile_context>
chip_gen: v6e
topology: v6e:2x2x1
jax: 0.10.0
libtpu: 0.0.40
codegen_flags: <defaults>
</compile_context>

<pallas_src>
import functools

import jax
import jax.numpy as jnp
from jax.experimental import pallas as pl
from jax.experimental.pallas import tpu as pltpu


def _tpu_caps():
    """Return (vmem_capacity_bytes, has_bf16_vpu, tensorcores_per_chip)."""
    kind = ""
    try:
        kind = jax.devices()[0].device_kind.lower()
    except Exception:
        pass
    is_v7 = "7" in kind
    is_old = any(v in kind for v in ("v5", "v4", "v3", "v2"))
    try:
        vmem_bytes = int(pltpu.get_tpu_info().vmem_capacity_bytes)
    except Exception:
        vmem_bytes = (64 if is_v7 else 128) * 1024 * 1024
    has_bf16_vpu = not is_old          # v5e and older: no bf16 VPU path
    num_tc = 2 if is_v7 else 1         # v7x megacore
    return vmem_bytes, has_bf16_vpu, num_tc


def _ffnn_kernel(x_ref, w1_ref, b1_ref, w2_ref, b2_ref, w3_ref, b3_ref, out_ref,
                 *, act_dtype):
    # Three MXU matmuls (bf16 operands, f32 accumulate). Bias-add / ReLU run in
    # act_dtype: bf16 on v6e/v7x (packs 2 rows/sublane, halves VPU passes),
    # f32 on v5e (no bf16 VPU).
    x = x_ref[...].astype(jnp.bfloat16)
    h1 = jnp.dot(x, w1_ref[...], preferred_element_type=jnp.float32)
    h1 = jnp.maximum(h1.astype(act_dtype) + b1_ref[...], 0.0)
    h2 = jnp.dot(h1.astype(jnp.bfloat16), w2_ref[...],
                 preferred_element_type=jnp.float32)
    h2 = jnp.maximum(h2.astype(act_dtype) + b2_ref[...], 0.0)
    y = jnp.dot(h2.astype(jnp.bfloat16), w3_ref[...],
                preferred_element_type=jnp.float32)
    out_ref[...] = (y + b3_ref[...]).astype(out_ref.dtype)


def _choose_batch_tile(B, in_dim, u1, u2, out_dim, x_itemsize, vmem_budget,
                       max_tm=8192):
    """Largest batch tile (multiple of 8, <= max_tm) fitting the VMEM budget."""
    # Resident: single-buffered bf16 weights + (<= f32) biases.
    resident = 2 * (in_dim * u1 + u1 * u2 + u2 * out_dim) + 4 * (u1 + u2 + out_dim)
    # Per batch-row: double-buffered x/y streams + live intermediates
    # (f32 accumulators + bf16 copies of x/h1/h2).
    per_row = (2 * x_itemsize * in_dim + 2 * 4 * out_dim
               + 2 * in_dim + 6 * (u1 + u2) + 4 * out_dim)
    avail = int((vmem_budget - resident) * 0.8)        # ~20% Mosaic-scratch headroom
    tm = max(8, min(max_tm, avail // max(per_row, 1)))
    tm = (tm // 8) * 8
    if B <= tm:
        return B          # single block covering the whole batch (full-dim block is legal)
    return tm


@functools.partial(jax.jit, static_argnames=("horizons", "n_features"))
def ffnn_forward(src, params, *, horizons, n_features):
    """Equivalent of FFNN.forward(src, trg, train); trg/train don't affect it."""
    B = src.shape[0]
    x = src.reshape(B, -1)                           # torch.flatten(src, start_dim=1)
    if (not jnp.issubdtype(x.dtype, jnp.floating)) or x.dtype.itemsize > 4:
        x = x.astype(jnp.float32)                    # only upcast ints / f64
    in_dim = x.shape[1]

    vmem_bytes, has_bf16_vpu, num_tc = _tpu_caps()
    act_dtype = jnp.bfloat16 if has_bf16_vpu else jnp.float32

    w1, b1, w2, b2, w3, b3 = params
    # The module only returns output[:, :, 0]; after the (horizons, n_features)
    # reshape those are columns 0, n_features, 2*n_features, ... of layer 3.
    w3 = w3[:, 0::n_features]
    b3 = b3[:, 0::n_features]
    out_dim = w3.shape[1]                            # == horizons
    u1, u2 = w1.shape[1], w2.shape[1]

    w1b, w2b, w3b = (w.astype(jnp.bfloat16) for w in (w1, w2, w3))
    b1a, b2a = b1.astype(act_dtype), b2.astype(act_dtype)
    b3f = b3.astype(jnp.float32)

    # Generation-aware VMEM: ~96 MiB scoped limit on 128 MiB parts (v5e/v6e),
    # ~48 MiB on v7x (64 MiB physical); tile budget is 2/3 of the limit.
    vmem_limit = int(min(vmem_bytes * 3 // 4, 96 * 1024 * 1024))
    tile_budget = vmem_limit * 2 // 3

    tm = _choose_batch_tile(B, in_dim, u1, u2, out_dim, x.dtype.itemsize, tile_budget)
    # Megacore (v7x): keep >= 2 (pref. >= 4) batch tiles so both TCs get work.
    if num_tc >= 2 and B >= 16:
        target_tiles = 4 if B >= 4096 else 2
        desired = ((-(-B // target_tiles)) + 7) // 8 * 8
        tm = min(tm, max(8, desired))

    grid_b = pl.cdiv(B, tm)
    b_pad = grid_b * tm
    if b_pad != B:
        x = jnp.pad(x, ((0, b_pad - B), (0, 0)))

    def _const_spec(shape):
        # Constant index_map -> block never changes; single-buffer it.
        try:
            return pl.BlockSpec(shape, lambda i: (0, 0),
                                pipeline_mode=pl.Buffered(1))
        except TypeError:          # older jax without pipeline_mode kwarg
            return pl.BlockSpec(shape, lambda i: (0, 0))

    # TODO(synk): if in_dim/u1/u2 grow into the thousands, add a K grid axis
    # (marked "arbitrary") with an f32 VMEM accumulator so resident weights plus
    # the (tm, in_dim) block still fit v7x's 64 MiB VMEM.
    out = pl.pallas_call(
        functools.partial(_ffnn_kernel, act_dtype=act_dtype),
        out_shape=jax.ShapeDtypeStruct((b_pad, out_dim), jnp.float32),
        grid=(grid_b,),
        in_specs=[
            pl.BlockSpec((tm, in_dim), lambda i: (i, 0)),   # batch-tiled activations
            _const_spec((in_dim, u1)),
            _const_spec((1, u1)),
            _const_spec((u1, u2)),
            _const_spec((1, u2)),
            _const_spec((u2, out_dim)),
            _const_spec((1, out_dim)),
        ],
        out_specs=pl.BlockSpec((tm, out_dim), lambda i: (i, 0)),
        compiler_params=pltpu.CompilerParams(
            dimension_semantics=("parallel",),   # shard batch tiles across TCs (v7x)
            vmem_limit_bytes=vmem_limit,
        ),
    )(x, w1b, b1a, w2b, b2a, w3b, b3f)

    return out[:B]   # (B, horizons) == reshape(output)[:, :, 0]


def init_params(key, units_layer1, units_layer2, lags, horizons, n_features):
    """Deterministic init mimicking nn.Linear (uniform +/- 1/sqrt(fan_in)).

    Weights stored as (in, out) — transposed vs PyTorch's (out, in).
    Biases stored as (1, out) so they stay 2-D inside the kernel.
    """
    dims = [
        (lags * n_features, units_layer1),
        (units_layer1, units_layer2),
        (units_layer2, horizons * n_features),
    ]
    params = []
    for (fan_in, fan_out) in dims:
        key, kw, kb = jax.random.split(key, 3)
        bound = 1.0 / (fan_in ** 0.5)
        w = jax.random.uniform(kw, (fan_in, fan_out), jnp.float32, -bound, bound)
        b = jax.random.uniform(kb, (1, fan_out), jnp.float32, -bound, bound)
        params.extend([w, b])
    return tuple(params)


if __name__ == "__main__":
    # Small shapes consistent with the module.
    B = 2
    lags = 8
    n_features = 4
    horizons = 4
    units_layer1 = 32
    units_layer2 = 32

    key = jax.random.PRNGKey(0)
    key, k_src, k_trg = jax.random.split(key, 3)

    src = jax.random.normal(k_src, (B, lags, n_features), jnp.float32)
    trg = jax.random.normal(k_trg, (B, horizons, n_features), jnp.float32)  # unused
    train = True  # unused by the forward pass

    params = init_params(key, units_layer1, units_layer2, lags, horizons, n_features)

    out = ffnn_forward(src, params, horizons=horizons, n_features=n_features)
    out = jax.block_until_ready(out)
    assert out.shape == (B, horizons), out.shape

    w1, b1, w2, b2, w3, b3 = params
    x = src.reshape(B, -1)
    bf = jnp.bfloat16
    _, _has_bf16_vpu, _ = _tpu_caps()
    act_dtype = bf if _has_bf16_vpu else jnp.float32

    # Reference 1: mirrors the kernel's mixed precision exactly
    # (bf16 MXU operands, f32 accumulate, act_dtype bias-add/ReLU).
    h1 = jnp.maximum(jnp.dot(x.astype(bf), w1.astype(bf),
                             preferred_element_type=jnp.float32).astype(act_dtype)
                     + b1.astype(act_dtype), 0.0)
    h2 = jnp.maximum(jnp.dot(h1.astype(bf), w2.astype(bf),
                             preferred_element_type=jnp.float32).astype(act_dtype)
                     + b2.astype(act_dtype), 0.0)
    y = jnp.dot(h2.astype(bf), w3.astype(bf),
                preferred_element_type=jnp.float32) + b3
    ref_mixed = y.reshape(B, horizons, n_features)[:, :, 0]
    assert jnp.allclose(out, ref_mixed, atol=2e-3, rtol=2e-3), \
        float(jnp.max(jnp.abs(out - ref_mixed)))

    # Reference 2: full f32 math (original PyTorch semantics); looser tolerance
    # because the kernel feeds bf16 operands to the MXU.
    h1 = jnp.maximum(x @ w1 + b1, 0.0)
    h2 = jnp.maximum(h1 @ w2 + b2, 0.0)
    ref_f32 = (h2 @ w3 + b3).reshape(B, horizons, n_features)[:, :, 0]
    assert jnp.allclose(out, ref_f32, atol=5e-2, rtol=5e-2), \
        float(jnp.max(jnp.abs(out - ref_f32)))

    print("KERNEL_OK")
</pallas_src>

<mosaic_0001>
module attributes {stable_mosaic.version = 11 : i64} {
  func.func @_ffnn_kernel(%arg0: i32, %arg1: memref<2x32xf32, #tpu.memory_space<vmem>>, %arg2: memref<32x32xbf16, #tpu.memory_space<vmem>>, %arg3: memref<1x32xbf16, #tpu.memory_space<vmem>>, %arg4: memref<32x32xbf16, #tpu.memory_space<vmem>>, %arg5: memref<1x32xbf16, #tpu.memory_space<vmem>>, %arg6: memref<32x4xbf16, #tpu.memory_space<vmem>>, %arg7: memref<1x4xf32, #tpu.memory_space<vmem>>, %arg8: memref<2x4xf32, #tpu.memory_space<vmem>>) attributes {dimension_semantics = [#tpu.dimension_semantics<parallel>], iteration_bounds = array<i64: 1>, scalar_prefetch = 0 : i64, scratch_operands = 0 : i64, tpu.core_type = #tpu.core_type<tc>, window_params = [{transform_indices = @transform_0, window_bounds = array<i64: 2, 32>}, {pipeline_mode = #tpu.pipeline_mode<synchronous>, transform_indices = @transform_1, window_bounds = array<i64: 32, 32>}, {pipeline_mode = #tpu.pipeline_mode<synchronous>, transform_indices = @transform_2, window_bounds = array<i64: 1, 32>}, {pipeline_mode = #tpu.pipeline_mode<synchronous>, transform_indices = @transform_3, window_bounds = array<i64: 32, 32>}, {pipeline_mode = #tpu.pipeline_mode<synchronous>, transform_indices = @transform_4, window_bounds = array<i64: 1, 32>}, {pipeline_mode = #tpu.pipeline_mode<synchronous>, transform_indices = @transform_5, window_bounds = array<i64: 32, 4>}, {pipeline_mode = #tpu.pipeline_mode<synchronous>, transform_indices = @transform_6, window_bounds = array<i64: 1, 4>}, {transform_indices = @transform_7, window_bounds = array<i64: 2, 4>}]} {
    %c0 = arith.constant 0 : index
    %c0_0 = arith.constant 0 : index
    %0 = vector.load %arg1[%c0, %c0_0] : memref<2x32xf32, #tpu.memory_space<vmem>>, vector<2x32xf32>
    %1 = arith.truncf %0 : vector<2x32xf32> to vector<2x32xbf16>
    %c0_1 = arith.constant 0 : index
    %c0_2 = arith.constant 0 : index
    %2 = vector.load %arg2[%c0_1, %c0_2] : memref<32x32xbf16, #tpu.memory_space<vmem>>, vector<32x32xbf16>
    %cst = arith.constant dense<0.000000e+00> : vector<2x32xf32>
    %3 = tpu.matmul %1, %2, %cst {dimension_numbers = #tpu.dot_dimension_numbers<[1], [0], [0], [1], [0, 0, 1, 1], [], []>} : vector<2x32xbf16>, vector<32x32xbf16>, vector<2x32xf32> -> vector<2x32xf32>
    %4 = arith.truncf %3 : vector<2x32xf32> to vector<2x32xbf16>
    %c0_3 = arith.constant 0 : index
    %c0_4 = arith.constant 0 : index
    %5 = vector.load %arg3[%c0_3, %c0_4] : memref<1x32xbf16, #tpu.memory_space<vmem>>, vector<1x32xbf16>
    %6 = vector.broadcast %5 : vector<1x32xbf16> to vector<2x32xbf16>
    %7 = arith.addf %4, %6 : vector<2x32xbf16>
    %cst_5 = arith.constant 0.000000e+00 : bf16
    %8 = vector.broadcast %cst_5 : bf16 to vector<2x32xbf16>
    %9 = arith.maximumf %7, %8 : vector<2x32xbf16>
    %c0_6 = arith.constant 0 : index
    %c0_7 = arith.constant 0 : index
    %10 = vector.load %arg4[%c0_6, %c0_7] : memref<32x32xbf16, #tpu.memory_space<vmem>>, vector<32x32xbf16>
    %cst_8 = arith.constant dense<0.000000e+00> : vector<2x32xf32>
    %11 = tpu.matmul %9, %10, %cst_8 {dimension_numbers = #tpu.dot_dimension_numbers<[1], [0], [0], [1], [0, 0, 1, 1], [], []>} : vector<2x32xbf16>, vector<32x32xbf16>, vector<2x32xf32> -> vector<2x32xf32>
    %12 = arith.truncf %11 : vector<2x32xf32> to vector<2x32xbf16>
    %c0_9 = arith.constant 0 : index
    %c0_10 = arith.constant 0 : index
    %13 = vector.load %arg5[%c0_9, %c0_10] : memref<1x32xbf16, #tpu.memory_space<vmem>>, vector<1x32xbf16>
    %14 = vector.broadcast %13 : vector<1x32xbf16> to vector<2x32xbf16>
    %15 = arith.addf %12, %14 : vector<2x32xbf16>
    %cst_11 = arith.constant 0.000000e+00 : bf16
    %16 = vector.broadcast %cst_11 : bf16 to vector<2x32xbf16>
    %17 = arith.maximumf %15, %16 : vector<2x32xbf16>
    %c0_12 = arith.constant 0 : index
    %c0_13 = arith.constant 0 : index
    %18 = vector.load %arg6[%c0_12, %c0_13] : memref<32x4xbf16, #tpu.memory_space<vmem>>, vector<32x4xbf16>
    %cst_14 = arith.constant dense<0.000000e+00> : vector<2x4xf32>
    %19 = tpu.matmul %17, %18, %cst_14 {dimension_numbers = #tpu.dot_dimension_numbers<[1], [0], [0], [1], [0, 0, 1, 1], [], []>} : vector<2x32xbf16>, vector<32x4xbf16>, vector<2x4xf32> -> vector<2x4xf32>
    %c0_15 = arith.constant 0 : index
    %c0_16 = arith.constant 0 : index
    %20 = vector.load %arg7[%c0_15, %c0_16] : memref<1x4xf32, #tpu.memory_space<vmem>>, vector<1x4xf32>
    %21 = vector.broadcast %20 : vector<1x4xf32> to vector<2x4xf32>
    %22 = arith.addf %19, %21 : vector<2x4xf32>
    %c0_17 = arith.constant 0 : index
    %c0_18 = arith.constant 0 : index
    %23 = vector.load %arg8[%c0_17, %c0_18] : memref<2x4xf32, #tpu.memory_space<vmem>>, vector<2x4xf32>
    tpu.vector_store %arg8[%c0_17, %c0_18], %22 {strides = array<i32>} : memref<2x4xf32, #tpu.memory_space<vmem>>, vector<2x4xf32>,
    return
  }
  func.func @transform_0(%arg0: i32) -> (i32, i32) {
    %c0_i32 = arith.constant 0 : i32
    %c0_i32_0 = arith.constant 0 : i32
    return %arg0, %c0_i32 : i32, i32
  }
  func.func @transform_1(%arg0: i32) -> (i32, i32) {
    %c0_i32 = arith.constant 0 : i32
    %c0_i32_0 = arith.constant 0 : i32
    %c0_i32_1 = arith.constant 0 : i32
    return %c0_i32, %c0_i32_0 : i32, i32
  }
  func.func @transform_2(%arg0: i32) -> (i32, i32) {
    %c0_i32 = arith.constant 0 : i32
    %c0_i32_0 = arith.constant 0 : i32
    %c0_i32_1 = arith.constant 0 : i32
    return %c0_i32, %c0_i32_0 : i32, i32
  }
  func.func @transform_3(%arg0: i32) -> (i32, i32) {
    %c0_i32 = arith.constant 0 : i32
    %c0_i32_0 = arith.constant 0 : i32
    %c0_i32_1 = arith.constant 0 : i32
    return %c0_i32, %c0_i32_0 : i32, i32
  }
  func.func @transform_4(%arg0: i32) -> (i32, i32) {
    %c0_i32 = arith.constant 0 : i32
    %c0_i32_0 = arith.constant 0 : i32
    %c0_i32_1 = arith.constant 0 : i32
    return %c0_i32, %c0_i32_0 : i32, i32
  }
  func.func @transform_5(%arg0: i32) -> (i32, i32) {
    %c0_i32 = arith.constant 0 : i32
    %c0_i32_0 = arith.constant 0 : i32
    %c0_i32_1 = arith.constant 0 : i32
    return %c0_i32, %c0_i32_0 : i32, i32
  }
  func.func @transform_6(%arg0: i32) -> (i32, i32) {
    %c0_i32 = arith.constant 0 : i32
    %c0_i32_0 = arith.constant 0 : i32
    %c0_i32_1 = arith.constant 0 : i32
    return %c0_i32, %c0_i32_0 : i32, i32
  }
  func.func @transform_7(%arg0: i32) -> (i32, i32) {
    %c0_i32 = arith.constant 0 : i32
    %c0_i32_0 = arith.constant 0 : i32
    return %arg0, %c0_i32 : i32, i32
  }
}

</mosaic_0001>

<llo_original>
// kernel: ffnn_forward.1
$region0: #{ffnn_forward.1}
  #allocation0 [shape = 'u32[]', space=smem, size = 0x4, offset = 0x4, fixed_abs, tag = 'smem constant byte address 0x4 - core index']
  #allocation1 [shape = 'u32[144,128]{1,0:T(1,128)}', space=vmem, size = 0x12000, scoped, tag = 'internal scratch']
  %s0 = inlined_call_operand.vmem [shape: f32[2,32], index: 0, kind: input, shape index: {}]
  %s1 = inlined_call_operand.vmem [shape: bf16[32,32], index: 1, kind: input, shape index: {}]
  %s2 = inlined_call_operand.vmem [shape: bf16[1,32], index: 2, kind: input, shape index: {}]
  %s3 = inlined_call_operand.vmem [shape: bf16[32,32], index: 3, kind: input, shape index: {}]
  %s4 = inlined_call_operand.vmem [shape: bf16[1,32], index: 4, kind: input, shape index: {}]
  %s5 = inlined_call_operand.vmem [shape: bf16[32,4], index: 5, kind: input, shape index: {}]
  %s6 = inlined_call_operand.vmem [shape: f32[1,4], index: 6, kind: input, shape index: {}]
  %s7 = inlined_call_operand.hbm [shape: f32[2,4], index: 7, kind: output, shape index: {}]
  %s8 = sld [smem:[#allocation0]]
  $region38: #{ffnn_forward.1} parent=0
    _
  %s10 = ssub.s32 1, %s8
  %s11 = scalar_select 0, %s10, %s8
  $region1: #{ffnn_forward.1} parent=0
    #allocation2 [shape = 'u8[1024]{0}', space=vmem, size = 0x400, scoped, tag = 'output window, operand 0, single buffered']
    #allocation3 [shape = 's32[1]{0}', space=sflag, size = 0x4, scoped, tag = 'scoped memory for ffnn_forward.1']
    %12 = vsyncpa [#allocation3], 0
    // Predicated region
    $region2: #{ffnn_forward.1} parent=1 // pred_check
      _
    $region3: #{ffnn_forward.1} parent=1 // pred_check_branch
      %14 = sbr.rel (0) target = $region5
    $region4: #{ffnn_forward.1} parent=1 // pred_region
      _
    $region5: #{ffnn_forward.1} parent=1 // pred_fallthru
      _
    // Predicated region
    $region6: #{ffnn_forward.1} parent=1 // pred_check
      _
    $region7: #{ffnn_forward.1} parent=1 // pred_check_branch
      %16 = sbr.rel (0) target = $region9
    $region8: #{ffnn_forward.1} parent=1 // pred_region
      _
    $region9: #{ffnn_forward.1} parent=1 // pred_fallthru
      _
    // Predicated region
    $region10: #{ffnn_forward.1} parent=1 // pred_check
      _
    $region11: #{ffnn_forward.1} parent=1 // pred_check_branch
      %18 = sbr.rel (0) target = $region13
    $region12: #{ffnn_forward.1} parent=1 // pred_region
      _
    $region13: #{ffnn_forward.1} parent=1 // pred_fallthru
      _
    // Predicated region
    $region14: #{ffnn_forward.1} parent=1 // pred_check
      _
    $region15: #{ffnn_forward.1} parent=1 // pred_check_branch
      %20 = sbr.rel (0) target = $region17
    $region16: #{ffnn_forward.1} parent=1 // pred_region
      _
    $region17: #{ffnn_forward.1} parent=1 // pred_fallthru
      _
    // Predicated region
    $region18: #{ffnn_forward.1} parent=1 // pred_check
      _
    $region19: #{ffnn_forward.1} parent=1 // pred_check_branch
      %22 = sbr.rel (0) target = $region21
    $region20: #{ffnn_forward.1} parent=1 // pred_region
      _
    $region21: #{ffnn_forward.1} parent=1 // pred_fallthru
      _
    // Predicated region
    $region22: #{ffnn_forward.1} parent=1 // pred_check
      _
    $region23: #{ffnn_forward.1} parent=1 // pred_check_branch
      %24 = sbr.rel (0) target = $region25
    $region24: #{ffnn_forward.1} parent=1 // pred_region
      _
    $region25: #{ffnn_forward.1} parent=1 // pred_fallthru
      _
    // Predicated region
    $region26: #{ffnn_forward.1} parent=1 // pred_check
      _
    $region27: #{ffnn_forward.1} parent=1 // pred_check_branch
      %26 = sbr.rel (0) target = $region29
    $region28: #{ffnn_forward.1} parent=1 // pred_region
      _
    $region29: #{ffnn_forward.1} parent=1 // pred_fallthru
      _
    %v28 = vld [vmem:[%s0] sm:$0x3]
    %v29 = vpack.c.bf16 %v28, %v28
    %v30 = vld [vmem:[%s1] sm:$0xf]
    %v31 = vld [vmem:[%s1 + $0x4] sm:$0xf]
    %v32 = vld [vmem:[%s1 + $0x8] sm:$0xf]
    %v33 = vld [vmem:[%s1 + $0xc] sm:$0xf]
    %v38 = vunpack.c.l.b16 %v30
    %v39 = vunpack.c.l.b16 %v31
    %v40 = vunpack.c.l.b16 %v32
    %v41 = vunpack.c.l.b16 %v33
    %v42 = vpack.c.b16 %v39, %v38
    %v43 = vpack.c.b16 %v41, %v40
    %vm46 = vcmask 261120
    %v48 = vsel %vm46, %v29, 0
    %50 = vmatprep.subr.bf16.mxu0 0
    %51 = vmatpush1.bf16.msra.mxu0 0
    %52 = vmatprep.subr.bf16.mxu0 0
    %53 = vmatpush1.bf16.msra.mxu0 0
    %54 = vmatprep.subr.bf16.mxu0 0
    %55 = vmatpush1.bf16.msra.mxu0 0
    %56 = vmatprep.subr.bf16.mxu0 0
    %57 = vmatpush1.bf16.msra.mxu0 0
    %58 = vmatprep.subr.bf16.mxu0 0
    %59 = vmatpush1.bf16.msra.mxu0 0
    %60 = vmatprep.subr.bf16.mxu0 0
    %61 = vmatpush1.bf16.msra.mxu0 0
    %62 = vmatprep.subr.bf16.mxu0 0
    %63 = vmatpush1.bf16.msra.mxu0 %v43
    %64 = vmatprep.subr.bf16.mxu0 0
    %65 = vmatpush1.bf16.msra.mxu0 %v42
    %66 = vmatprep.subr.bf16.mxu0 0
    %67 = vmatpush2.bf16.msra.mxu0 0
    %68 = vmatprep.subr.bf16.mxu0 0
    %69 = vmatpush2.bf16.msra.mxu0 0
    %70 = vmatprep.subr.bf16.mxu0 0
    %71 = vmatpush2.bf16.msra.mxu0 0
    %72 = vmatprep.subr.bf16.mxu0 0
    %73 = vmatpush2.bf16.msra.mxu0 0
    %74 = vmatprep.subr.bf16.mxu0 0
    %75 = vmatpush2.bf16.msra.mxu0 0
    %76 = vmatprep.subr.bf16.mxu0 0
    %77 = vmatpush2.bf16.msra.mxu0 0
    %78 = vmatprep.subr.bf16.mxu0 0
    %79 = vmatpush2.bf16.msra.mxu0 0
    %80 = vmatprep.subr.bf16.mxu0 0
    %81 = vmatpush2.bf16.msra.mxu0 0
    %82 = vmatprep.mubr.bf16.mxu0 0
    %83 = vmatmul.mubr.bf16.gmra.mxu0 %v48
    %v84 = vpop.f32.mrf.mxu0
    %v85 = vadd.f32 0.0, %v84
    %v86 = vpop.f32.mrf.mxu0
    %v87 = vpop.f32.mrf.mxu0
    %v88 = vpop.f32.mrf.mxu0
    %89 = vdwg.mxu0
    %v90 = vpack.c.bf16 %v85, %v85
    %v91 = vld [vmem:[%s2] sm:$0x1]
    %v93 = vpack.i.b16 %v91, %v91
    %v95 = vlaneseq
    %v96 = vshrl.u32 %v95, 7
    %v97 = vsub.s32 0, %v96
    %v98 = vrot.slane %v93, %v97
    %v99 = vadd.bf16 %v90, %v98
    %v100 = vmax.bf16 %v99, 0
    %v101 = vld [vmem:[%s3] sm:$0xf]
    %v102 = vld [vmem:[%s3 + $0x4] sm:$0xf]
    %v103 = vld [vmem:[%s3 + $0x8] sm:$0xf]
    %v104 = vld [vmem:[%s3 + $0xc] sm:$0xf]
    %v109 = vunpack.c.l.b16 %v101
    %v110 = vunpack.c.l.b16 %v102
    %v111 = vunpack.c.l.b16 %v103
    %v112 = vunpack.c.l.b16 %v104
    %v113 = vpack.c.b16 %v110, %v109
    %v114 = vpack.c.b16 %v112, %v111
    %v118 = vsel %vm46, %v100, 0
    %120 = vmatprep.subr.bf16.mxu0 0
    %121 = vmatpush1.bf16.msra.mxu0 0
    %122 = vmatprep.subr.bf16.mxu0 0
    %123 = vmatpush1.bf16.msra.mxu0 0
    %124 = vmatprep.subr.bf16.mxu0 0
    %125 = vmatpush1.bf16.msra.mxu0 0
    %126 = vmatprep.subr.bf16.mxu0 0
    %127 = vmatpush1.bf16.msra.mxu0 0
    %128 = vmatprep.subr.bf16.mxu0 0
    %129 = vmatpush1.bf16.msra.mxu0 0
    %130 = vmatprep.subr.bf16.mxu0 0
    %131 = vmatpush1.bf16.msra.mxu0 0
    %132 = vmatprep.subr.bf16.mxu0 0
    %133 = vmatpush1.bf16.msra.mxu0 %v114
    %134 = vmatprep.subr.bf16.mxu0 0
    %135 = vmatpush1.bf16.msra.mxu0 %v113
    %136 = vmatprep.subr.bf16.mxu0 0
    %137 = vmatpush2.bf16.msra.mxu0 0
    %138 = vmatprep.subr.bf16.mxu0 0
    %139 = vmatpush2.bf16.msra.mxu0 0
    %140 = vmatprep.subr.bf16.mxu0 0
    %141 = vmatpush2.bf16.msra.mxu0 0
    %142 = vmatprep.subr.bf16.mxu0 0
    %143 = vmatpush2.bf16.msra.mxu0 0
    %144 = vmatprep.subr.bf16.mxu0 0
    %145 = vmatpush2.bf16.msra.mxu0 0
    %146 = vmatprep.subr.bf16.mxu0 0
    %147 = vmatpush2.bf16.msra.mxu0 0
    %148 = vmatprep.subr.bf16.mxu0 0
    %149 = vmatpush2.bf16.msra.mxu0 0
    %150 = vmatprep.subr.bf16.mxu0 0
    %151 = vmatpush2.bf16.msra.mxu0 0
    %152 = vmatprep.mubr.bf16.mxu0 0
    %153 = vmatmul.mubr.bf16.gmra.mxu0 %v118
    %v154 = vpop.f32.mrf.mxu0
    %v155 = vadd.f32 0.0, %v154
    %v156 = vpop.f32.mrf.mxu0
    %v157 = vpop.f32.mrf.mxu0
    %v158 = vpop.f32.mrf.mxu0
    %159 = vdwg.mxu0
    %v160 = vpack.c.bf16 %v155, %v155
    %v161 = vld [vmem:[%s4] sm:$0x1]
    %v163 = vpack.i.b16 %v161, %v161
    %v165 = vlaneseq
    %v166 = vshrl.u32 %v165, 7
    %v167 = vsub.s32 0, %v166
    %v168 = vrot.slane %v163, %v167
    %v169 = vadd.bf16 %v160, %v168
    %v170 = vmax.bf16 %v169, 0
    %v171 = vld [vmem:[%s5] sm:$0xf]
    %v172 = vld [vmem:[%s5 + $0x4] sm:$0xf]
    %v173 = vld [vmem:[%s5 + $0x8] sm:$0xf]
    %v174 = vld [vmem:[%s5 + $0xc] sm:$0xf]
    %v175 = vld [vmem:[%s6] sm:$0x1]
    %v177 = vlaneseq
    %v178 = vshrl.u32 %v177, 7
    %v179 = vsub.s32 0, %v178
    %v180 = vrot.slane %v175, %v179
    %v186 = vunpack.c.l.b16 %v171
    %v187 = vunpack.c.l.b16 %v172
    %v188 = vunpack.c.l.b16 %v173
    %v189 = vunpack.c.l.b16 %v174
    %v190 = vpack.c.b16 %v187, %v186
    %v191 = vpack.c.b16 %v189, %v188
    %v195 = vsel %vm46, %v170, 0
    %197 = vmatprep.subr.bf16.mxu0 0
    %198 = vmatpush1.bf16.msra.mxu0 0
    %199 = vmatprep.subr.bf16.mxu0 0
    %200 = vmatpush1.bf16.msra.mxu0 0
    %201 = vmatprep.subr.bf16.mxu0 0
    %202 = vmatpush1.bf16.msra.mxu0 0
    %203 = vmatprep.subr.bf16.mxu0 0
    %204 = vmatpush1.bf16.msra.mxu0 0
    %205 = vmatprep.subr.bf16.mxu0 0
    %206 = vmatpush1.bf16.msra.mxu0 0
    %207 = vmatprep.subr.bf16.mxu0 0
    %208 = vmatpush1.bf16.msra.mxu0 0
    %209 = vmatprep.subr.bf16.mxu0 0
    %210 = vmatpush1.bf16.msra.mxu0 %v191
    %211 = vmatprep.subr.bf16.mxu0 0
    %212 = vmatpush1.bf16.msra.mxu0 %v190
    %213 = vmatprep.subr.bf16.mxu0 0
    %214 = vmatpush2.bf16.msra.mxu0 0
    %215 = vmatprep.subr.bf16.mxu0 0
    %216 = vmatpush2.bf16.msra.mxu0 0
    %217 = vmatprep.subr.bf16.mxu0 0
    %218 = vmatpush2.bf16.msra.mxu0 0
    %219 = vmatprep.subr.bf16.mxu0 0
    %220 = vmatpush2.bf16.msra.mxu0 0
    %221 = vmatprep.subr.bf16.mxu0 0
    %222 = vmatpush2.bf16.msra.mxu0 0
    %223 = vmatprep.subr.bf16.mxu0 0
    %224 = vmatpush2.bf16.msra.mxu0 0
    %225 = vmatprep.subr.bf16.mxu0 0
    %226 = vmatpush2.bf16.msra.mxu0 0
    %227 = vmatprep.subr.bf16.mxu0 0
    %228 = vmatpush2.bf16.msra.mxu0 0
    %229 = vmatprep.mubr.bf16.mxu0 0
    %230 = vmatmul.mubr.bf16.gmra.mxu0 %v195
    %v231 = vpop.f32.mrf.mxu0
    %v232 = vadd.f32 %v180, %v231
    %v233 = vpop.f32.mrf.mxu0
    %v234 = vpop.f32.mrf.mxu0
    %v235 = vpop.f32.mrf.mxu0
    %236 = vdwg.mxu0
    %vm237 = vcmask 25600
    %238 = vst.msk [vmem:[#allocation2] sm:$0x3] %vm237, %v232
    // Predicated region
    $region30: #{ffnn_forward.1} parent=1 // pred_check
      _
    $region31: #{ffnn_forward.1} parent=1 // pred_check_branch
      %240 = sbr.rel (0) target = $region33
    $region32: #{ffnn_forward.1} parent=1 // pred_region
      %s242 = ssub.s32 32, 32
      %243 = vsyncadd [#allocation3], %s242
      %s245 = sshll.u32 [#allocation2], 4
      %s246 = int_to_ptr.vmem [resolvable:$true] %s245
      %248 = dma.vmem_to_hbm [thread:$0]  %s246, 32, %s7, [#allocation3]
    $region33: #{ffnn_forward.1} parent=1 // pred_fallthru
      _
    // Predicated region
    $region34: #{ffnn_forward.1} parent=1 // pred_check
      _
    $region35: #{ffnn_forward.1} parent=1 // pred_check_branch
      %250 = sbr.rel (0) target = $region37
    $region36: #{ffnn_forward.1} parent=1 // pred_region
      %251 = dma.done [#allocation3], 32
    $region37: #{ffnn_forward.1} parent=1 // pred_fallthru
      _
    %252 = vsyncpa [#allocation3], 1

</llo_original>
